<compile_context>
chip_gen: v5e
topology: v5e:2x2
jax: 0.10.0
libtpu: 0.0.40
codegen_flags: <defaults>
</compile_context>

<pallas_src>
import jax
import jax.numpy as jnp
from jax.experimental import pallas as pl
from jax.experimental.pallas import tpu as pltpu

_LANE = 128          # vreg lane width: last block dim must be a multiple of this
# ~2 MiB per f32 tile (4096 rows x 128 lanes x 4 B).  With 1 input + 1 output,
# each double-buffered, that is ~8 MiB live VMEM -> safe on v5e/v6e/v7x defaults.
_BLOCK_ROWS = 4096


def _to_long_kernel(x_ref, o_ref):
    # Elementwise cast; float -> int truncates toward zero (matches torch.long()).
    o_ref[...] = x_ref[...].astype(o_ref.dtype)


def to_long(x: jax.Array) -> jax.Array:
    """Pallas equivalent of `x.long()` (int64 emulated as int32 on TPU)."""
    orig_shape = x.shape
    n = x.size

    # Flatten to a lane-dense 2-D view: (rows, 128).  Pad the flat tail (if any)
    # so the last dim is exactly a lane multiple; the pad is sliced off below.
    flat = x.reshape(-1)
    pad = (-n) % _LANE
    if pad:
        flat = jnp.pad(flat, (0, pad))
    rows = flat.size // _LANE
    x2 = flat.reshape(rows, _LANE)

    bytes_accessed = x2.size * (x2.dtype.itemsize + jnp.dtype(jnp.int32).itemsize)
    cost = pl.CostEstimate(flops=0, transcendentals=0, bytes_accessed=bytes_accessed)

    if rows <= _BLOCK_ROWS:
        # Small input: single grid-free invocation, whole array is one VMEM block.
        out2 = pl.pallas_call(
            _to_long_kernel,
            out_shape=jax.ShapeDtypeStruct((rows, _LANE), jnp.int32),
            cost_estimate=cost,
        )(x2)
    else:
        # Large input: 1-D parallel grid over big lane-dense row blocks.
        grid = (pl.cdiv(rows, _BLOCK_ROWS),)
        out2 = pl.pallas_call(
            _to_long_kernel,
            out_shape=jax.ShapeDtypeStruct((rows, _LANE), jnp.int32),
            grid=grid,
            in_specs=[pl.BlockSpec((_BLOCK_ROWS, _LANE), lambda i: (i, 0))],
            out_specs=pl.BlockSpec((_BLOCK_ROWS, _LANE), lambda i: (i, 0)),
            compiler_params=pltpu.CompilerParams(
                dimension_semantics=("parallel",)
            ),
            cost_estimate=cost,
        )(x2)

    out_flat = out2.reshape(-1)
    if pad:
        out_flat = out_flat[:n]
    return out_flat.reshape(orig_shape)


if __name__ == "__main__":
    key = jax.random.PRNGKey(0)
    # Small NCHW input consistent with the module's forward.
    x = jax.random.normal(key, (2, 4, 16, 16), dtype=jnp.float32) * 10.0

    y = to_long(x)
    jax.block_until_ready(y)

    # Sanity check against plain-JAX reference (truncation-toward-zero cast).
    y_ref = x.astype(jnp.int32)
    assert y.dtype == jnp.int32
    assert y.shape == x.shape
    assert bool(jnp.all(y == y_ref))

    print("KERNEL_OK")
</pallas_src>

<mosaic_0001>
module attributes {stable_mosaic.version = 11 : i64} {
  func.func @_to_long_kernel(%arg0: memref<16x128xf32, #tpu.memory_space<vmem>>, %arg1: memref<16x128xi32, #tpu.memory_space<vmem>>) attributes {dimension_semantics = [], scalar_prefetch = 0 : i64, scratch_operands = 0 : i64, tpu.core_type = #tpu.core_type<tc>} {
    %c0 = arith.constant 0 : index
    %c0_0 = arith.constant 0 : index
    %0 = vector.load %arg0[%c0, %c0_0] : memref<16x128xf32, #tpu.memory_space<vmem>>, vector<16x128xf32>
    %1 = arith.fptosi %0 : vector<16x128xf32> to vector<16x128xi32>
    %c0_1 = arith.constant 0 : index
    %c0_2 = arith.constant 0 : index
    %2 = vector.load %arg1[%c0_1, %c0_2] : memref<16x128xi32, #tpu.memory_space<vmem>>, vector<16x128xi32>
    tpu.vector_store %arg1[%c0_1, %c0_2], %1 {strides = array<i32>} : memref<16x128xi32, #tpu.memory_space<vmem>>, vector<16x128xi32>,
    return
  }
}

</mosaic_0001>

<llo_original>
// kernel: tpu_custom_call.1
$region0: #{tpu_custom_call.1}
  #allocation0 [shape = 'u32[]', space=smem, size = 0x4, offset = 0x4, fixed_abs, tag = 'smem constant byte address 0x4 - core index']
  #allocation1 [shape = 'u32[72,128]{1,0:T(1,128)}', space=vmem, size = 0x9000, scoped, tag = 'internal scratch']
  %s0 = inlined_call_operand.hbm [shape: f32[16,128], index: 0, kind: input, shape index: {}]
  %s1 = inlined_call_operand.hbm [shape: s32[16,128], index: 1, kind: output, shape index: {}]
  %s2 = sld [smem:[#allocation0]]
  $region18: #{tpu_custom_call.1} parent=0
    _
  %s4 = ssub.s32 1, %s2
  %s5 = scalar_select 0, %s4, %s2
  $region1: #{tpu_custom_call.1} parent=0
    #allocation2 [shape = 'u8[8192]{0}', space=vmem, size = 0x2000, scoped, tag = 'input window, operand 0, single buffered']
    #allocation3 [shape = 's32[1]{0}', space=sflag, size = 0x4, scoped, tag = 'scoped memory for tpu_custom_call.1']
    #allocation4 [shape = 's32[1]{0}', space=sflag, size = 0x4, scoped, tag = 'scoped memory for tpu_custom_call.1']
    #allocation5 [shape = 'u8[8192]{0}', space=vmem, size = 0x2000, scoped, tag = 'output window, operand 0, single buffered']
    %6 = vsyncpa [#allocation3], 0
    %7 = vsyncpa [#allocation4], 0
    // Predicated region
    $region2: #{tpu_custom_call.1} parent=1 // pred_check
      _
    $region3: #{tpu_custom_call.1} parent=1 // pred_check_branch
      %9 = sbr.rel (0) target = $region5
    $region4: #{tpu_custom_call.1} parent=1 // pred_region
      %11 = vsyncadd [#allocation3], 0
      %s12 = sshll.u32 %s0, 4
      %s13 = int_to_ptr.hbm [resolvable:$true] %s12
      %s14 = sshll.u32 [#allocation2], 4
      %s15 = int_to_ptr.vmem [resolvable:$true] %s14
      %20 = dma.hbm_to_vmem [thread:$0]  %s13, 256, %s15, [#allocation3], 128, 128, 8
    $region5: #{tpu_custom_call.1} parent=1 // pred_fallthru
      _
    // Predicated region
    $region6: #{tpu_custom_call.1} parent=1 // pred_check
      _
    $region7: #{tpu_custom_call.1} parent=1 // pred_check_branch
      %22 = sbr.rel (0) target = $region9
    $region8: #{tpu_custom_call.1} parent=1 // pred_region
      %24 = dma.done [#allocation3], 256
    $region9: #{tpu_custom_call.1} parent=1 // pred_fallthru
      _
    %v25 = vld [vmem:[#allocation2] sm:$0xff]
    %v26 = vld [vmem:[#allocation2 + $0x8] sm:$0xff]
    %v27 = vcvt.f32.s32.to.zero.pseudo %v25
    %v28 = vcvt.f32.s32.to.zero.pseudo %v26
    %29 = vst [vmem:[#allocation5] sm:$0xff] %v27
    %30 = vst [vmem:[#allocation5 + $0x8] sm:$0xff] %v28
    // Predicated region
    $region10: #{tpu_custom_call.1} parent=1 // pred_check
      _
    $region11: #{tpu_custom_call.1} parent=1 // pred_check_branch
      %32 = sbr.rel (0) target = $region13
    $region12: #{tpu_custom_call.1} parent=1 // pred_region
      %34 = vsyncadd [#allocation4], 0
      %s35 = sshll.u32 [#allocation5], 4
      %s36 = int_to_ptr.vmem [resolvable:$true] %s35
      %s37 = sshll.u32 %s1, 4
      %s38 = int_to_ptr.hbm [resolvable:$true] %s37
      %43 = dma.vmem_to_hbm [thread:$0]  %s36, 256, %s38, [#allocation4], 128, 128, 8
    $region13: #{tpu_custom_call.1} parent=1 // pred_fallthru
      _
    // Predicated region
    $region14: #{tpu_custom_call.1} parent=1 // pred_check
      _
    $region15: #{tpu_custom_call.1} parent=1 // pred_check_branch
      %45 = sbr.rel (0) target = $region17
    $region16: #{tpu_custom_call.1} parent=1 // pred_region
      %47 = dma.done [#allocation4], 256
    $region17: #{tpu_custom_call.1} parent=1 // pred_fallthru
      _
    %48 = vsyncpa [#allocation3], 1
    %49 = vsyncpa [#allocation4], 1

</llo_original>
